<compile_context>
chip_gen: v6e
topology: v6e:2x2x1
jax: 0.10.0
libtpu: 0.0.40
codegen_flags: <defaults>
</compile_context>

<pallas_src>
import math
from functools import partial

import jax
import jax.numpy as jnp
from jax.experimental import pallas as pl
from jax.experimental.pallas import tpu as pltpu

_LANES = 384  # 3 coords * 128 lanes: one row = 128 whole interleaved points


def _cdiv(a: int, b: int) -> int:
    return -(-a // b)


def _round_up(x: int, m: int) -> int:
    return (x + m - 1) // m * m


def _rotate_kernel(coef_ref, x_ref, o_ref):
    # coef_ref : (5, 384)  f32 VMEM -- per-lane coefficient rows [k0, km1, km2, kp1, kp2]
    # x_ref    : (TR, 384) f32 VMEM -- interleaved points (x0,y0,z0,x1,...), 128/row
    # o_ref    : (TR, 384) f32 VMEM
    v = x_ref[...]
    L = v.shape[-1]
    # v[n-1], v[n-2], v[n+1], v[n+2] along lanes (row-wise; wrap-around terms are
    # multiplied by exactly-zero coefficients, and L % 3 == 0 keeps points in-row).
    vm1 = pltpu.roll(v, 1, axis=1)
    vm2 = pltpu.roll(v, 2, axis=1)
    vp1 = pltpu.roll(v, L - 1, axis=1)
    vp2 = pltpu.roll(v, L - 2, axis=1)
    o_ref[...] = (
        coef_ref[0:1, :] * v
        + coef_ref[1:2, :] * vm1
        + coef_ref[2:3, :] * vm2
        + coef_ref[3:4, :] * vp1
        + coef_ref[4:5, :] * vp2
    )


@partial(jax.jit, static_argnames=("rows_per_tile",))
def random_rotation(points: jax.Array, theta: jax.Array, *, rows_per_tile: int = 1024) -> jax.Array:
    """Pallas equivalent of RandomRotation.forward.

    points: (B, 3) float32 point cloud (row-major, interleaved x,y,z).
    theta:  (3,)   float32 angles in [-pi, pi) (supplied explicitly/deterministically).
    rows_per_tile: 384-lane rows per grid step (128 points/row); sweep 512..2048.
    """
    points = points.astype(jnp.float32)
    B = points.shape[0]
    cos = jnp.cos(theta.astype(jnp.float32))
    c0, c1, c2 = cos[0], cos[1], cos[2]

    # Per-lane coefficient rows (pattern repeats every 3 lanes).  For n % 3 ==
    #   0: out = c0*v[n]   + c1*v[n+1] + c2*v[n+2]
    #   1: out = c0*v[n-1] +    v[n]   + c2*v[n+1]
    #   2: out =    v[n-2] + c1*v[n-1] +    v[n]
    pos = jnp.arange(_LANES, dtype=jnp.int32) % 3
    is0, is1, is2 = pos == 0, pos == 1, pos == 2
    zero = jnp.zeros((_LANES,), jnp.float32)
    one = jnp.ones((_LANES,), jnp.float32)
    k0 = jnp.where(is0, c0, one)                        # * v[n]
    km1 = jnp.where(is1, c0, jnp.where(is2, c1, zero))  # * v[n-1]
    km2 = jnp.where(is2, one, zero)                     # * v[n-2]
    kp1 = jnp.where(is0, c1, jnp.where(is1, c2, zero))  # * v[n+1]
    kp2 = jnp.where(is0, c2, zero)                      # * v[n+2]
    coef = jnp.stack([k0, km1, km2, kp1, kp2], axis=0)  # (5, 384), built once

    # Flat interleaved view: zero-copy reshape when B % 128 == 0; otherwise one
    # small tail pad (the only remaining wrapper-side copy).
    total = 3 * B
    flat = points.reshape(total)
    n_rows = _cdiv(total, _LANES)
    padded_total = n_rows * _LANES
    if padded_total != total:
        flat = jnp.pad(flat, (0, padded_total - total))
    x2d = flat.reshape(n_rows, _LANES)

    # Row-tile size: multiple of 8 sublanes, clamped so >= 2 tiles where possible
    # (both v7x TensorCores get work).  Block VMEM = rows * 1536 B (1.5 MiB @ 1024
    # rows); in+out double-buffered ~= 4x that.
    if n_rows > 8:
        tr = min(int(rows_per_tile), _round_up(_cdiv(n_rows, 2), 8))
        tr = max(8, (tr // 8) * 8)
    else:
        tr = n_rows  # single exact block for tiny inputs
    grid = (_cdiv(n_rows, tr),)

    out2d = pl.pallas_call(
        _rotate_kernel,
        out_shape=jax.ShapeDtypeStruct((n_rows, _LANES), jnp.float32),
        grid=grid,
        in_specs=[
            pl.BlockSpec((5, _LANES), lambda i: (0, 0)),   # coefficients, fetched once
            pl.BlockSpec((tr, _LANES), lambda i: (i, 0)),  # lane/sublane-dense stream
        ],
        out_specs=pl.BlockSpec((tr, _LANES), lambda i: (i, 0)),
        compiler_params=pltpu.CompilerParams(
            dimension_semantics=("parallel",),  # 2 TCs on v7x; no-op on v5e/v6e
        ),
        cost_estimate=pl.CostEstimate(
            flops=27 * B, transcendentals=0, bytes_accessed=24 * B
        ),
    )(coef, x2d)

    out = out2d.reshape(padded_total)
    if padded_total != total:
        out = out[:total]
    return out.reshape(B, 3)


if __name__ == "__main__":
    key = jax.random.PRNGKey(0)
    kp, kt = jax.random.split(key)

    # Small demo shape (module operates on a (B, 3) point cloud).
    B = 16
    points = jax.random.normal(kp, (B, 3), dtype=jnp.float32)
    # Deterministic stand-in for np.random.rand(3): uniform [0,1) -> [-pi, pi).
    rand = jax.random.uniform(kt, (3,), dtype=jnp.float32)
    theta = rand * (math.pi - (-math.pi)) + (-math.pi)

    out = jax.block_until_ready(random_rotation(points, theta))

    # Plain-JAX reference (matches the module's einsum-with-eye(3) semantics).
    c = jnp.cos(theta)
    rot_ref = jnp.array(
        [[c[0], c[0], 1.0], [c[1], 1.0, c[1]], [c[2], c[2], 1.0]], dtype=jnp.float32
    )
    ref = jnp.einsum("bi,ij->bj", points, rot_ref, precision="highest")
    assert out.shape == (B, 3)
    assert jnp.allclose(out, ref, atol=1e-5, rtol=1e-5)

    # B multiple of 128: fully zero-copy wrapper path, multi-tile grid.
    B2 = 4096
    pts2 = jax.random.normal(jax.random.PRNGKey(1), (B2, 3), dtype=jnp.float32)
    out2 = jax.block_until_ready(random_rotation(pts2, theta))
    ref2 = jnp.einsum("bi,ij->bj", pts2, rot_ref, precision="highest")
    assert out2.shape == (B2, 3)
    assert jnp.allclose(out2, ref2, atol=1e-5, rtol=1e-5)

    # B not a multiple of 128: small tail pad + Pallas-masked partial edge block.
    B3 = 20000
    pts3 = jax.random.normal(jax.random.PRNGKey(2), (B3, 3), dtype=jnp.float32)
    out3 = jax.block_until_ready(random_rotation(pts3, theta))
    ref3 = jnp.einsum("bi,ij->bj", pts3, rot_ref, precision="highest")
    assert out3.shape == (B3, 3)
    assert jnp.allclose(out3, ref3, atol=1e-5, rtol=1e-5)

    print("KERNEL_OK")
</pallas_src>

<mosaic_0001>
module attributes {stable_mosaic.version = 11 : i64} {
  func.func @_rotate_kernel(%arg0: i32, %arg1: memref<5x384xf32, #tpu.memory_space<vmem>>, %arg2: memref<1x384xf32, #tpu.memory_space<vmem>>, %arg3: memref<1x384xf32, #tpu.memory_space<vmem>>) attributes {dimension_semantics = [#tpu.dimension_semantics<parallel>], iteration_bounds = array<i64: 1>, scalar_prefetch = 0 : i64, scratch_operands = 0 : i64, tpu.core_type = #tpu.core_type<tc>, window_params = [{pipeline_mode = #tpu.pipeline_mode<synchronous>, transform_indices = @transform_0, window_bounds = array<i64: 5, 384>}, {transform_indices = @transform_1, window_bounds = array<i64: 1, 384>}, {transform_indices = @transform_2, window_bounds = array<i64: 1, 384>}]} {
    %c0 = arith.constant 0 : index
    %c0_0 = arith.constant 0 : index
    %0 = vector.load %arg2[%c0, %c0_0] : memref<1x384xf32, #tpu.memory_space<vmem>>, vector<1x384xf32>
    %c1_i32 = arith.constant 1 : i32
    %1 = tpu.dynamic_rotate %0 by %c1_i32 dim 1 : vector<1x384xf32>, i32 -> vector<1x384xf32>
    %c2_i32 = arith.constant 2 : i32
    %2 = tpu.dynamic_rotate %0 by %c2_i32 dim 1 : vector<1x384xf32>, i32 -> vector<1x384xf32>
    %c383_i32 = arith.constant 383 : i32
    %3 = tpu.dynamic_rotate %0 by %c383_i32 dim 1 : vector<1x384xf32>, i32 -> vector<1x384xf32>
    %c382_i32 = arith.constant 382 : i32
    %4 = tpu.dynamic_rotate %0 by %c382_i32 dim 1 : vector<1x384xf32>, i32 -> vector<1x384xf32>
    %c0_1 = arith.constant 0 : index
    %c0_2 = arith.constant 0 : index
    %5 = vector.load %arg1[%c0_1, %c0_2] : memref<5x384xf32, #tpu.memory_space<vmem>>, vector<1x384xf32>
    %6 = arith.mulf %5, %0 : vector<1x384xf32>
    %c1 = arith.constant 1 : index
    %c0_3 = arith.constant 0 : index
    %7 = vector.load %arg1[%c1, %c0_3] : memref<5x384xf32, #tpu.memory_space<vmem>>, vector<1x384xf32>
    %8 = arith.mulf %7, %1 : vector<1x384xf32>
    %9 = arith.addf %6, %8 : vector<1x384xf32>
    %c2 = arith.constant 2 : index
    %c0_4 = arith.constant 0 : index
    %10 = vector.load %arg1[%c2, %c0_4] : memref<5x384xf32, #tpu.memory_space<vmem>>, vector<1x384xf32>
    %11 = arith.mulf %10, %2 : vector<1x384xf32>
    %12 = arith.addf %9, %11 : vector<1x384xf32>
    %c3 = arith.constant 3 : index
    %c0_5 = arith.constant 0 : index
    %13 = vector.load %arg1[%c3, %c0_5] : memref<5x384xf32, #tpu.memory_space<vmem>>, vector<1x384xf32>
    %14 = arith.mulf %13, %3 : vector<1x384xf32>
    %15 = arith.addf %12, %14 : vector<1x384xf32>
    %c4 = arith.constant 4 : index
    %c0_6 = arith.constant 0 : index
    %16 = vector.load %arg1[%c4, %c0_6] : memref<5x384xf32, #tpu.memory_space<vmem>>, vector<1x384xf32>
    %17 = arith.mulf %16, %4 : vector<1x384xf32>
    %18 = arith.addf %15, %17 : vector<1x384xf32>
    %c0_7 = arith.constant 0 : index
    %c0_8 = arith.constant 0 : index
    %19 = vector.load %arg3[%c0_7, %c0_8] : memref<1x384xf32, #tpu.memory_space<vmem>>, vector<1x384xf32>
    tpu.vector_store %arg3[%c0_7, %c0_8], %18 {strides = array<i32>} : memref<1x384xf32, #tpu.memory_space<vmem>>, vector<1x384xf32>,
    return
  }
  func.func @transform_0(%arg0: i32) -> (i32, i32) {
    %c0_i32 = arith.constant 0 : i32
    %c0_i32_0 = arith.constant 0 : i32
    %c0_i32_1 = arith.constant 0 : i32
    return %c0_i32, %c0_i32_0 : i32, i32
  }
  func.func @transform_1(%arg0: i32) -> (i32, i32) {
    %c0_i32 = arith.constant 0 : i32
    %c0_i32_0 = arith.constant 0 : i32
    return %arg0, %c0_i32 : i32, i32
  }
  func.func @transform_2(%arg0: i32) -> (i32, i32) {
    %c0_i32 = arith.constant 0 : i32
    %c0_i32_0 = arith.constant 0 : i32
    return %arg0, %c0_i32 : i32, i32
  }
}

</mosaic_0001>

<llo_original>
// kernel: cos.1
$region0: #{cos.1}
  #allocation0 [shape = 's32[1]{0}', space=sflag, size = 0x4, scoped, tag = 'scoped memory for cos.1']
  %s0 = inlined_call_operand.vmem [shape: f32[3], index: 0, kind: input, shape index: {}]
  %s1 = inlined_call_operand.vmem [shape: f32[3], index: 1, kind: output, shape index: {}]
  %v2 = vld [vmem:[%s0] sm:$0x1]
  %v3 = vand.u32 2147483647, %v2
  %vm4 = vcmp.le.f32.partialorder %v3, 0.7853982
  %vm5 = vcmp.lt.s32.totalorder %v2, 0
  %v6 = vand.u32 %v2, 2139095040
  %v7 = vshrl.u32 %v6, 23
  %v8 = vsub.s32 %v7, 127
  %v9 = vand.u32 2147483647, %v2
  %v10 = vand.u32 %v9, 8388607
  %v11 = vor.u32 %v10, 8388608
  %v12 = vsub.s32 0, %v11
  %v13 = vadd.s32 %v8, 1
  %vm14 = vcmp.gt.s32.totalorder %v13, 0
  %v15 = vsel %vm14, %v13, 0
  %v16 = vshrl.u32 %v15, 5
  %v17 = vand.u32 %v15, 31
  %v18 = vsub.s32 32, %v17
  %v19 = vshrl.u32 683565275, %v18
  %v20 = vshll.u32 683565275, %v17
  %v21 = vshrl.u32 2475754826, %v18
  %v22 = vor.u32 %v20, %v21
  %v23 = vshll.u32 2475754826, %v17
  %v24 = vshrl.u32 2131351028, %v18
  %v25 = vor.u32 %v23, %v24
  %v26 = vshll.u32 2131351028, %v17
  %v27 = vshrl.u32 2102212464, %v18
  %v28 = vor.u32 %v26, %v27
  %v29 = vshll.u32 2102212464, %v17
  %v30 = vshrl.u32 920167782, %v18
  %v31 = vor.u32 %v29, %v30
  %v32 = vshll.u32 920167782, %v17
  %v33 = vshrl.u32 1326507024, %v18
  %v34 = vor.u32 %v32, %v33
  %vm35 = vcmp.lt.s32.totalorder %v16, 1
  %vm36 = vcmp.lt.s32.totalorder %v16, 2
  %vm37 = vcmp.lt.s32.totalorder %v16, 3
  %vm38 = vcmp.lt.s32.totalorder %v16, 4
  %v39 = vsel %vm35, %v19, %v22
  %v40 = vsel %vm38, %v28, 2102212464
  %v41 = vsel %vm37, %v25, %v40
  %v42 = vsel %vm36, %v39, %v41
  %v43 = vsel %vm35, %v22, %v25
  %v44 = vsel %vm38, %v31, 920167782
  %v45 = vsel %vm37, %v28, %v44
  %v46 = vsel %vm36, %v43, %v45
  %v47 = vsel %vm35, %v25, %v28
  %v48 = vsel %vm38, %v34, 1326507024
  %v49 = vsel %vm37, %v31, %v48
  %v50 = vsel %vm36, %v47, %v49
  %v51 = vshll.u32 %v11, 8
  %v52 = vmul.u32.u64.compose %v51, %v50
  %v53 = vextract.low.u32 %v52
  %v54 = vextract.high.u32 %v52
  %v55 = vmul.u32.u64.compose %v51, %v46
  %v56 = vextract.low.u32 %v55
  %v57 = vextract.high.u32 %v55
  %v58 = vmul.u32 %v51, %v42
  %v59 = vadd.s32 %v54, %v56
  %vm60 = vc.u32 %v54, %v56
  %v61 = vadd.s32 %v57, 1
  %v62 = vsel %vm60, %v61, %v57
  %v63 = vadd.s32 %v58, %v62
  %v64 = vadd.s32 %v63, 536870912
  %v65 = vshrl.u32 %v64, 30
  %v66 = vshll.u32 %v65, 30
  %v67 = vsub.s32 %v63, %v66
  %vm68 = vcmp.lt.s32.totalorder %v67, 0
  %v69 = vsub.s32 0, %v67
  %v70 = vsel %vm68, %v69, %v67
  %v71 = vclz %v70
  %v72 = vsub.s32 %v71, 2
  %vm73 = vcmp.gt.s32.totalorder 0, %v72
  %v74 = vsel %vm73, 0, %v72
  %v75 = vsub.s32 32, %v74
  %v76 = vshll.u32 %v67, %v74
  %v77 = vshrl.u32 %v59, %v75
  %v78 = vor.u32 %v76, %v77
  %v79 = vsub.s32 4294967266, %v74
  %v80 = vadd.s32 %v79, 127
  %v81 = vshll.u32 %v80, 23
  %v82 = vor.u32 4788187, %v81
  %v83 = vand.u32 2147483647, %v82
  %v85 = vcvt.s32.f32 %v78
  %v86 = vmul.f32 %v85, %v83
  %v87 = vxor.u32 %v86, 2147483648
  %v88 = vsel %vm5, %v87, %v86
  %v89 = vsub.s32 4, %v65
  %v90 = vsel %vm5, %v89, %v65
  %v91 = vsel %vm4, %v2, %v88
  %v92 = vsel %vm4, 0, %v90
  %v93 = vcosq.f32.pop %v91
  %v94 = vsinq.f32.pop %v91
  %vm95 = vweird.f32 %v2
  %v96 = vand.u32 %v92, 3
  %vm97 = vcmp.lt.s32.totalorder %v96, 2
  %vm98 = vcmp.eq.s32.totalorder %v96, 0
  %v99 = vxor.u32 %v94, 2147483648
  %v100 = vsel %vm98, %v93, %v99
  %vm101 = vcmp.eq.s32.totalorder %v96, 2
  %v102 = vxor.u32 %v93, 2147483648
  %v103 = vsel %vm101, %v102, %v94
  %v104 = vsel %vm97, %v100, %v103
  %v105 = vsel %vm95, nan, %v104
  %106 = vst [vmem:[%s1] sm:$0x1] %v105

// kernel: random_rotation.1
$region0: #{random_rotation.1}
  #allocation0 [shape = 'u32[]', space=smem, size = 0x4, offset = 0x4, fixed_abs, tag = 'smem constant byte address 0x4 - core index']
  #allocation1 [shape = 'u32[144,128]{1,0:T(1,128)}', space=vmem, size = 0x12000, scoped, tag = 'internal scratch']
  %s0 = inlined_call_operand.vmem [shape: f32[5,384], index: 0, kind: input, shape index: {}]
  %s1 = inlined_call_operand.vmem [shape: f32[1,384], index: 1, kind: input, shape index: {}]
  %s2 = inlined_call_operand.vmem [shape: f32[1,384], index: 2, kind: output, shape index: {}]
  %s3 = sld [smem:[#allocation0]]
  $region18: #{random_rotation.1} parent=0
    _
  %s5 = ssub.s32 1, %s3
  %s6 = scalar_select 0, %s5, %s3
  // Predicated region
  $region2: #{random_rotation.1} parent=0 // pred_check
    _
  $region3: #{random_rotation.1} parent=0 // pred_check_branch
    %8 = sbr.rel (0) target = $region5
  $region4: #{random_rotation.1} parent=0 // pred_region
    _
  $region5: #{random_rotation.1} parent=0 // pred_fallthru
    _
  // Predicated region
  $region6: #{random_rotation.1} parent=0 // pred_check
    _
  $region7: #{random_rotation.1} parent=0 // pred_check_branch
    %10 = sbr.rel (0) target = $region9
  $region8: #{random_rotation.1} parent=0 // pred_region
    _
  $region9: #{random_rotation.1} parent=0 // pred_fallthru
    _
  %v11 = vld [vmem:[%s1] sm:$0x7]
  %v13 = vlaneseq
  %v14 = vshrl.u32 %v13, 7
  %v15 = vsub.s32 0, %v14
  %v16 = vrot.slane %v11, %v15
  %v17 = vlaneseq
  %v18 = vshrl.u32 %v17, 7
  %v19 = vsub.s32 1, %v18
  %v20 = vrot.slane %v11, %v19
  %v21 = vlaneseq
  %v22 = vshrl.u32 %v21, 7
  %v23 = vsub.s32 2, %v22
  %v24 = vrot.slane %v11, %v23
  %28 = vrot.lane.b32.xlu0 %v16, 1
  %v29 = vpop.permute.xlu0 %28
  %30 = vrot.lane.b32.xlu0 %v20, 1
  %v31 = vpop.permute.xlu0 %30
  %32 = vrot.lane.b32.xlu0 %v24, 1
  %v33 = vpop.permute.xlu0 %32
  %v34 = vlaneseq
  %v35 = vand.u32 %v34, 127
  %vm36 = vcmp.lt.s32.totalorder %v35, 1
  %v37 = vsel %vm36, %v31, %v33
  %v38 = vsel %vm36, %v29, %v31
  %v39 = vsel %vm36, %v33, %v29
  %40 = vrot.lane.b32.xlu0 %v16, 2
  %v41 = vpop.permute.xlu0 %40
  %42 = vrot.lane.b32.xlu0 %v20, 2
  %v43 = vpop.permute.xlu0 %42
  %44 = vrot.lane.b32.xlu0 %v24, 2
  %v45 = vpop.permute.xlu0 %44
  %vm46 = vcmp.lt.s32.totalorder %v35, 2
  %v47 = vsel %vm46, %v43, %v45
  %v48 = vsel %vm46, %v41, %v43
  %v49 = vsel %vm46, %v45, %v41
  %50 = vrot.lane.b32.xlu0 %v16, 127
  %v51 = vpop.permute.xlu0 %50
  %52 = vrot.lane.b32.xlu0 %v20, 127
  %v53 = vpop.permute.xlu0 %52
  %54 = vrot.lane.b32.xlu0 %v24, 127
  %v55 = vpop.permute.xlu0 %54
  %vm56 = vcmp.lt.s32.totalorder %v35, 127
  %v57 = vsel %vm56, %v53, %v55
  %v58 = vsel %vm56, %v51, %v53
  %v59 = vsel %vm56, %v55, %v51
  %60 = vrot.lane.b32.xlu0 %v16, 126
  %v61 = vpop.permute.xlu0 %60
  %62 = vrot.lane.b32.xlu0 %v20, 126
  %v63 = vpop.permute.xlu0 %62
  %64 = vrot.lane.b32.xlu0 %v24, 126
  %v65 = vpop.permute.xlu0 %64
  %vm66 = vcmp.lt.s32.totalorder %v35, 126
  %v67 = vsel %vm66, %v63, %v65
  %v68 = vsel %vm66, %v61, %v63
  %v69 = vsel %vm66, %v65, %v61
  %v70 = vld [vmem:[%s0] ss:$8 sm:$0x7]
  %v71 = vmul.f32 %v70, %v11
  %s72 = scalar_lea.vmem %s0, 1
  %v73 = vld [vmem:[%s72] ss:$8 sm:$0x7]
  %v77 = vcombine.low %v39, %v38
  %v79 = vunpack.c.l.s4 1966171168
  %v80 = vunpack.c.0.s8 %v79
  %v81 = vlaneseq
  %v82 = vshrl.u32 %v81, 7
  %v83 = vsub.s32 %v80, %v82
  %v84 = vrot.slane %v77, %v83
  %v86 = vunpack.c.l.s4 1966171168
  %v87 = vunpack.c.0.s8 %v86
  %v88 = vlaneseq
  %v89 = vshrl.u32 %v88, 7
  %v90 = vsub.s32 %v87, %v89
  %v91 = vrot.slane %v37, %v90
  %v92 = vcombine.low %v84, %v91
  %v94 = vunpack.c.l.s4 1966171168
  %v95 = vunpack.c.0.s8 %v94
  %v96 = vlaneseq
  %v97 = vshrl.u32 %v96, 7
  %v98 = vsub.s32 %v95, %v97
  %v99 = vrot.slane %v92, %v98
  %v101 = vmul.f32 %v73, %v99
  %v102 = vadd.f32 %v71, %v101
  %s103 = scalar_lea.vmem %s0, 2
  %v104 = vld [vmem:[%s103] ss:$8 sm:$0x7]
  %v108 = vcombine.low %v49, %v48
  %v110 = vunpack.c.l.s4 1966171168
  %v111 = vunpack.c.0.s8 %v110
  %v112 = vlaneseq
  %v113 = vshrl.u32 %v112, 7
  %v114 = vsub.s32 %v111, %v113
  %v115 = vrot.slane %v108, %v114
  %v117 = vunpack.c.l.s4 1966171168
  %v118 = vunpack.c.0.s8 %v117
  %v119 = vlaneseq
  %v120 = vshrl.u32 %v119, 7
  %v121 = vsub.s32 %v118, %v120
  %v122 = vrot.slane %v47, %v121
  %v123 = vcombine.low %v115, %v122
  %v125 = vunpack.c.l.s4 1966171168
  %v126 = vunpack.c.0.s8 %v125
  %v127 = vlaneseq
  %v128 = vshrl.u32 %v127, 7
  %v129 = vsub.s32 %v126, %v128
  %v130 = vrot.slane %v123, %v129
  %v132 = vmul.f32 %v104, %v130
  %v133 = vadd.f32 %v102, %v132
  %s134 = scalar_lea.vmem %s0, 3
  %v135 = vld [vmem:[%s134] ss:$8 sm:$0x7]
  %v139 = vcombine.low %v58, %v57
  %v141 = vunpack.c.l.s4 1966171168
  %v142 = vunpack.c.0.s8 %v141
  %v143 = vlaneseq
  %v144 = vshrl.u32 %v143, 7
  %v145 = vsub.s32 %v142, %v144
  %v146 = vrot.slane %v139, %v145
  %v148 = vunpack.c.l.s4 1966171168
  %v149 = vunpack.c.0.s8 %v148
  %v150 = vlaneseq
  %v151 = vshrl.u32 %v150, 7
  %v152 = vsub.s32 %v149, %v151
  %v153 = vrot.slane %v59, %v152
  %v154 = vcombine.low %v146, %v153
  %v156 = vunpack.c.l.s4 1966171168
  %v157 = vunpack.c.0.s8 %v156
  %v158 = vlaneseq
  %v159 = vshrl.u32 %v158, 7
  %v160 = vsub.s32 %v157, %v159
  %v161 = vrot.slane %v154, %v160
  %v163 = vmul.f32 %v135, %v161
  %v164 = vadd.f32 %v133, %v163
  %s165 = scalar_lea.vmem %s0, 4
  %v166 = vld [vmem:[%s165] ss:$8 sm:$0x7]
  %v170 = vcombine.low %v68, %v67
  %v172 = vunpack.c.l.s4 1966171168
  %v173 = vunpack.c.0.s8 %v172
  %v174 = vlaneseq
  %v175 = vshrl.u32 %v174, 7
  %v176 = vsub.s32 %v173, %v175
  %v177 = vrot.slane %v170, %v176
  %v179 = vunpack.c.l.s4 1966171168
  %v180 = vunpack.c.0.s8 %v179
  %v181 = vlaneseq
  %v182 = vshrl.u32 %v181, 7
  %v183 = vsub.s32 %v180, %v182
  %v184 = vrot.slane %v69, %v183
  %v185 = vcombine.low %v177, %v184
  %v187 = vunpack.c.l.s4 1966171168
  %v188 = vunpack.c.0.s8 %v187
  %v189 = vlaneseq
  %v190 = vshrl.u32 %v189, 7
  %v191 = vsub.s32 %v188, %v190
  %v192 = vrot.slane %v185, %v191
  %v194 = vmul.f32 %v166, %v192
  %v195 = vadd.f32 %v164, %v194
  %v196 = vlaneseq
  %vm197 = vcmp.ge.s32.totalorder %v196, 0
  %vm198 = vcmp.lt.s32.totalorder %v196, 384
  %vm199 = vmand %vm197, %vm198
  %200 = vst.msk [vmem:[%s2] sm:$0x7] %vm199, %v195
  // Predicated region
  $region10: #{random_rotation.1} parent=0 // pred_check
    _
  $region11: #{random_rotation.1} parent=0 // pred_check_branch
    %202 = sbr.rel (0) target = $region13
  $region12: #{random_rotation.1} parent=0 // pred_region
    _
  $region13: #{random_rotation.1} parent=0 // pred_fallthru
    _
  // Predicated region
  $region14: #{random_rotation.1} parent=0 // pred_check
    _
  $region15: #{random_rotation.1} parent=0 // pred_check_branch
    %204 = sbr.rel (0) target = $region17
  $region16: #{random_rotation.1} parent=0 // pred_region
    _
  $region17: #{random_rotation.1} parent=0 // pred_fallthru
    _

</llo_original>
